<compile_context>
chip_gen: v5e
topology: v5e:2x2
jax: 0.10.0
libtpu: 0.0.40
codegen_flags: <defaults>
</compile_context>

<pallas_src>
import jax
import jax.numpy as jnp
from jax import lax
from jax.experimental import pallas as pl
from jax.experimental.pallas import tpu as pltpu

BN_EPS = 1e-5


def _round_up(x, m):
    return (x + m - 1) // m * m


# ----------------------------------------------------------------------------
# Kernel 1 (runs once, on the input chunk only): per-image per-channel
# sum / sum-of-squares.  Layer-output stats come out of the layer kernel.
# ----------------------------------------------------------------------------
def _chunk_stats_kernel(x_ref, sum_ref, sq_ref):
    x = x_ref[0]                                        # (k_pad, hw) lane-dense
    sum_ref[0] = jnp.sum(x, axis=-1, keepdims=True)
    sq_ref[0] = jnp.sum(x * x, axis=-1, keepdims=True)


def chunk_stats(chunk):
    n_imgs, k_pad, hw = chunk.shape
    sums, sqs = pl.pallas_call(
        _chunk_stats_kernel,
        grid=(n_imgs,),
        in_specs=[pl.BlockSpec((1, k_pad, hw), lambda n: (n, 0, 0))],
        out_specs=(pl.BlockSpec((1, k_pad, 1), lambda n: (n, 0, 0)),
                   pl.BlockSpec((1, k_pad, 1), lambda n: (n, 0, 0))),
        out_shape=(jax.ShapeDtypeStruct((n_imgs, k_pad, 1), jnp.float32),
                   jax.ShapeDtypeStruct((n_imgs, k_pad, 1), jnp.float32)),
        compiler_params=pltpu.CompilerParams(
            dimension_semantics=("parallel",)),
    )(chunk)
    # Tiny host-side reduction over images (megacore-safe per-step outputs).
    return jnp.sum(sums, axis=0)[:, 0], jnp.sum(sqs, axis=0)[:, 0]


# ----------------------------------------------------------------------------
# Kernel 2: fused BN(scale/shift) + ReLU + 1x1 bottleneck + 3x3 conv (pad=1)
#           per image, transposed lane-dense layout.  Also emits the new
#           chunk's per-image per-channel sum / sumsq (cached BN stats).
# ----------------------------------------------------------------------------
def _make_layer_kernel(n_chunks, k_pad, kout_pad, h_img, w_img):
    hw = h_img * w_img

    def kernel(*refs):
        chunk_refs = refs[:n_chunks]
        (scale_ref, shift_ref, w1t_ref, b1_ref, w3t_ref, b3_ref,
         mask_ref) = refs[n_chunks:n_chunks + 7]
        out_ref = refs[n_chunks + 7]
        sum_ref = refs[n_chunks + 8]
        sq_ref = refs[n_chunks + 9]
        act_ref = refs[n_chunks + 10]          # (C_in_pad, hw) VMEM scratch
        ycol_ref = refs[n_chunks + 11]         # (9*kout_pad, hw) VMEM scratch

        # ---- BatchNorm (folded scale/shift) + ReLU into the act scratch ----
        for idx in range(n_chunks):
            c0 = idx * k_pad                   # 8-sublane aligned writes
            xk = chunk_refs[idx][0]                                # (k_pad, hw)
            act_ref[c0:c0 + k_pad, :] = jnp.maximum(
                xk * scale_ref[c0:c0 + k_pad, :]
                + shift_ref[c0:c0 + k_pad, :], 0.0)

        # ---- 1x1 bottleneck: ONE big-contraction MXU dot -------------------
        y = jnp.dot(w1t_ref[...], act_ref[...],
                    preferred_element_type=jnp.float32) + b1_ref[...]

        # ---- 3x3 conv (padding=1): 9 taps = lane rolls + boundary masks ----
        for dh in range(3):
            for dw in range(3):
                tap = dh * 3 + dw
                s = (dh - 1) * w_img + (dw - 1)        # flat pixel shift
                if tap == 4:                           # center tap: mask==1
                    ycol_ref[tap * kout_pad:(tap + 1) * kout_pad, :] = y
                else:
                    t = pltpu.roll(y, shift=(-s) % hw, axis=1)
                    t = t * mask_ref[tap:tap + 1, :]   # zero out-of-image taps
                    ycol_ref[tap * kout_pad:(tap + 1) * kout_pad, :] = t

        out = jnp.dot(w3t_ref[...], ycol_ref[...],
                      preferred_element_type=jnp.float32) + b3_ref[...]
        out_ref[0] = out

        # ---- cached BN stats of the NEW chunk (for the next layer) ---------
        sum_ref[0] = jnp.sum(out, axis=-1, keepdims=True)
        sq_ref[0] = jnp.sum(out * out, axis=-1, keepdims=True)

    return kernel


def dense_layer(chunks, scale, shift, w1t_pad, b1_col, w3t_pad, b3_col, masks,
                h_img, w_img):
    n_imgs, k_pad, hw = chunks[0].shape
    kout_pad = w1t_pad.shape[0]
    c_in_pad = w1t_pad.shape[1]
    n_chunks = len(chunks)
    kernel = _make_layer_kernel(n_chunks, k_pad, kout_pad, h_img, w_img)

    chunk_spec = pl.BlockSpec((1, k_pad, hw), lambda n: (n, 0, 0))

    def const(shp):
        return pl.BlockSpec(tuple(shp), lambda n: (0,) * len(shp))

    # VMEM budget from actual shapes (double-buffered blocks + scratch) + slack.
    dbl_blocks = 4 * 2 * (n_chunks * k_pad * hw                 # chunk blocks
                          + kout_pad * hw + 2 * kout_pad        # outputs
                          + 2 * c_in_pad                        # scale/shift
                          + kout_pad * (c_in_pad + 9 * kout_pad + 2)
                          + 9 * hw)                             # masks
    scratch = 4 * (c_in_pad * hw + 9 * kout_pad * hw)
    vmem_limit = int(min(100 * 2 ** 20,
                         max(32 * 2 ** 20, dbl_blocks + scratch + (8 << 20))))

    out, sums, sqs = pl.pallas_call(
        kernel,
        grid=(n_imgs,),
        in_specs=[chunk_spec] * n_chunks
                 + [const(scale.shape), const(shift.shape),
                    const(w1t_pad.shape), const(b1_col.shape),
                    const(w3t_pad.shape), const(b3_col.shape),
                    const(masks.shape)],
        out_specs=(pl.BlockSpec((1, kout_pad, hw), lambda n: (n, 0, 0)),
                   pl.BlockSpec((1, kout_pad, 1), lambda n: (n, 0, 0)),
                   pl.BlockSpec((1, kout_pad, 1), lambda n: (n, 0, 0))),
        out_shape=(jax.ShapeDtypeStruct((n_imgs, kout_pad, hw), jnp.float32),
                   jax.ShapeDtypeStruct((n_imgs, kout_pad, 1), jnp.float32),
                   jax.ShapeDtypeStruct((n_imgs, kout_pad, 1), jnp.float32)),
        scratch_shapes=[pltpu.VMEM((c_in_pad, hw), jnp.float32),
                        pltpu.VMEM((9 * kout_pad, hw), jnp.float32)],
        compiler_params=pltpu.CompilerParams(
            dimension_semantics=("parallel",),   # images independent: megacore
            vmem_limit_bytes=vmem_limit),
    )(*chunks, scale, shift, w1t_pad, b1_col, w3t_pad, b3_col, masks)
    return out, jnp.sum(sums, axis=0)[:, 0], jnp.sum(sqs, axis=0)[:, 0]


# ----------------------------------------------------------------------------
# Host-side glue: stat folding, tap masks, weight re-layout, layer loop.
# ----------------------------------------------------------------------------
def fold_scale_shift(chunk_sums, chunk_sqs, gamma, beta, k, k_pad, count):
    """Fold cached per-chunk sums + BN affine params into scale/shift columns."""
    inv = 1.0 / float(count)
    scale_parts, shift_parts = [], []
    for idx in range(len(chunk_sums)):
        s = chunk_sums[idx][:k]
        q = chunk_sqs[idx][:k]
        mean = s * inv
        var = jnp.maximum(q * inv - mean * mean, 0.0)   # biased variance
        g = gamma[idx * k:(idx + 1) * k]
        b = beta[idx * k:(idx + 1) * k]
        sc = g * lax.rsqrt(var + BN_EPS)
        sh = b - mean * sc
        scale_parts.append(jnp.pad(sc, (0, k_pad - k)))  # padded channels -> 0
        shift_parts.append(jnp.pad(sh, (0, k_pad - k)))
    scale = jnp.concatenate(scale_parts).reshape(-1, 1)
    shift = jnp.concatenate(shift_parts).reshape(-1, 1)
    return scale, shift


def make_tap_masks(h_img, w_img):
    hh, ww = jnp.meshgrid(jnp.arange(h_img), jnp.arange(w_img), indexing="ij")
    rows = []
    for dh in range(3):
        for dw in range(3):
            oh, ow = dh - 1, dw - 1
            valid = ((hh + oh >= 0) & (hh + oh < h_img)
                     & (ww + ow >= 0) & (ww + ow < w_img))
            rows.append(valid.reshape(h_img * w_img))
    return jnp.stack(rows, axis=0).astype(jnp.float32)          # (9, H*W)


def _pad_w1t(w1, k, k_pad, n_chunks):
    kout = w1.shape[1]
    w1t = jnp.transpose(w1).reshape(kout, n_chunks, k)          # (kout, nc, k)
    w1t = jnp.pad(w1t, ((0, k_pad - kout), (0, 0), (0, k_pad - k)))
    return w1t.reshape(k_pad, n_chunks * k_pad)


def _pad_w3t(w3, k, k_pad):
    kout = w3.shape[3]
    w3t = jnp.transpose(w3, (3, 0, 1, 2))                       # (kout,3,3,kin)
    w3t = jnp.pad(w3t, ((0, k_pad - kout), (0, 0), (0, 0), (0, k_pad - k)))
    return w3t.reshape(k_pad, 9 * k_pad)


def dense_block_forward(x_nchw, params, n_layers):
    n_imgs, k, h_img, w_img = x_nchw.shape
    hw = h_img * w_img
    k_pad = _round_up(k, 8)                    # f32 sublane tile is 8

    # NCHW -> (N, C_pad, H*W): channels on sublanes, pixels lane-dense.
    chunk0 = jnp.pad(x_nchw.reshape(n_imgs, k, hw).astype(jnp.float32),
                     ((0, 0), (0, k_pad - k), (0, 0)))
    chunks = [chunk0]
    s0, q0 = chunk_stats(chunk0)               # one-time stats pass on input
    chunk_sums, chunk_sqs = [s0], [q0]

    masks = make_tap_masks(h_img, w_img)
    count = n_imgs * hw

    i = 0
    while i < n_layers:                        # preserve reference loop quirk
        gamma, beta, w1, b1, w3, b3 = params[i // 4]
        c_in, kout = w1.shape
        n_chunks = len(chunks)
        assert kout == k and w3.shape[3] == k and c_in == n_chunks * k

        # BN fold from CACHED sums (no pass over the state).
        scale, shift = fold_scale_shift(chunk_sums, chunk_sqs,
                                        gamma.reshape(-1), beta.reshape(-1),
                                        k, k_pad, count)

        # Host-side weight re-layout (tiny, once per layer), channel-padded.
        w1t_pad = _pad_w1t(w1, k, k_pad, n_chunks)      # (k_pad, n_chunks*k_pad)
        b1_col = jnp.pad(b1.reshape(-1), (0, k_pad - k)).reshape(k_pad, 1)
        w3t_pad = _pad_w3t(w3, k, k_pad)                # (k_pad, 9*k_pad)
        b3_col = jnp.pad(b3.reshape(-1), (0, k_pad - k)).reshape(k_pad, 1)

        new_chunk, s_new, q_new = dense_layer(
            chunks, scale, shift, w1t_pad, b1_col, w3t_pad, b3_col, masks,
            h_img, w_img)
        chunks.append(new_chunk)               # no per-layer HBM concatenate
        chunk_sums.append(s_new)
        chunk_sqs.append(q_new)
        i += 4

    # Single concatenate of the real channels at the very end.
    state = jnp.concatenate([c[:, :k, :] for c in chunks], axis=1)
    return state.reshape(n_imgs, -1, h_img, w_img)


# ----------------------------------------------------------------------------
# Pure-JAX reference (for correctness check)
# ----------------------------------------------------------------------------
def dense_block_ref(x_nchw, params, n_layers):
    state = jnp.transpose(x_nchw, (0, 2, 3, 1))
    i = 0
    while i < n_layers:
        gamma, beta, w1, b1, w3, b3 = params[i // 4]
        mean = jnp.mean(state, axis=(0, 1, 2), keepdims=True)
        var = jnp.mean((state - mean) ** 2, axis=(0, 1, 2), keepdims=True)
        act = jnp.maximum((state - mean) * lax.rsqrt(var + BN_EPS)
                          * gamma.reshape(1, 1, 1, -1)
                          + beta.reshape(1, 1, 1, -1), 0.0)
        y = lax.conv_general_dilated(
            act, w1.reshape(1, 1, *w1.shape), (1, 1), "VALID",
            dimension_numbers=("NHWC", "HWIO", "NHWC")) + b1.reshape(1, 1, 1, -1)
        l4 = lax.conv_general_dilated(
            y, w3, (1, 1), "SAME",
            dimension_numbers=("NHWC", "HWIO", "NHWC")) + b3.reshape(1, 1, 1, -1)
        state = jnp.concatenate([state, l4], axis=-1)
        i += 4
    return jnp.transpose(state, (0, 3, 1, 2))


# ----------------------------------------------------------------------------
# Deterministic parameter init (shapes per DenseBlock.__init__)
# ----------------------------------------------------------------------------
def init_params(key, n_layers, k):
    params = []
    for j in range(n_layers):
        c_in = (j + 1) * k
        key, k1, k2, k3, k4 = jax.random.split(key, 5)
        gamma = jnp.ones((1, c_in), jnp.float32)              # BN default init
        beta = jnp.zeros((1, c_in), jnp.float32)
        w1 = jax.random.normal(k1, (c_in, k), jnp.float32) * 0.1   # 1x1 (Cin,K)
        b1 = jax.random.normal(k2, (1, k), jnp.float32) * 0.1
        w3 = jax.random.normal(k3, (3, 3, k, k), jnp.float32) * 0.1  # HWIO
        b3 = jax.random.normal(k4, (1, k), jnp.float32) * 0.1
        params.append((gamma, beta, w1, b1, w3, b3))
    return params


if __name__ == "__main__":
    n_layers, k = 8, 4
    N, H, W = 2, 16, 16

    root = jax.random.PRNGKey(0)
    xkey, pkey = jax.random.split(root)
    x = jax.random.normal(xkey, (N, k, H, W), jnp.float32)    # NCHW like PyTorch
    params = init_params(pkey, n_layers, k)

    out = dense_block_forward(x, params, n_layers)
    out = jax.block_until_ready(out)

    n_iters = len(range(0, n_layers, 4))                      # forward-loop quirk
    expected_channels = k * (1 + n_iters)
    assert out.shape == (N, expected_channels, H, W), out.shape

    ref = jax.block_until_ready(dense_block_ref(x, params, n_layers))
    assert jnp.allclose(out, ref, rtol=2e-3, atol=2e-3), float(
        jnp.max(jnp.abs(out - ref)))

    print("KERNEL_OK")
</pallas_src>

<mosaic_0001>
module attributes {stable_mosaic.version = 11 : i64} {
  func.func @_chunk_stats_kernel(%arg0: i32, %arg1: memref<1x8x256xf32, #tpu.memory_space<vmem>>, %arg2: memref<1x8x1xf32, #tpu.memory_space<vmem>>, %arg3: memref<1x8x1xf32, #tpu.memory_space<vmem>>) attributes {dimension_semantics = [#tpu.dimension_semantics<parallel>], iteration_bounds = array<i64: 2>, scalar_prefetch = 0 : i64, scratch_operands = 0 : i64, tpu.core_type = #tpu.core_type<tc>, window_params = [{transform_indices = @transform_0, window_bounds = array<i64: 1, 8, 256>}, {transform_indices = @transform_1, window_bounds = array<i64: 1, 8, 1>}, {transform_indices = @transform_2, window_bounds = array<i64: 1, 8, 1>}]} {
    %c0 = arith.constant 0 : index
    %c0_0 = arith.constant 0 : index
    %c0_1 = arith.constant 0 : index
    %0 = vector.load %arg1[%c0, %c0_0, %c0_1] : memref<1x8x256xf32, #tpu.memory_space<vmem>>, vector<1x8x256xf32>
    %1 = vector.shape_cast %0 : vector<1x8x256xf32> to vector<8x256xf32>
    %cst = arith.constant dense<0.000000e+00> : vector<8xf32>
    %2 = vector.multi_reduction <add>, %1, %cst [1] : vector<8x256xf32> to vector<8xf32>
    %3 = vector.shape_cast %2 : vector<8xf32> to vector<8x1xf32>
    %c0_2 = arith.constant 0 : index
    %c0_3 = arith.constant 0 : index
    %c0_4 = arith.constant 0 : index
    %4 = vector.load %arg2[%c0_2, %c0_3, %c0_4] : memref<1x8x1xf32, #tpu.memory_space<vmem>>, vector<1x8x1xf32>
    %5 = vector.shape_cast %4 : vector<1x8x1xf32> to vector<8x1xf32>
    %6 = vector.shape_cast %3 : vector<8x1xf32> to vector<1x8x1xf32>
    tpu.vector_store %arg2[%c0_2, %c0_3, %c0_4], %6 {strides = array<i32>} : memref<1x8x1xf32, #tpu.memory_space<vmem>>, vector<1x8x1xf32>,
    %7 = arith.mulf %1, %1 : vector<8x256xf32>
    %cst_5 = arith.constant dense<0.000000e+00> : vector<8xf32>
    %8 = vector.multi_reduction <add>, %7, %cst_5 [1] : vector<8x256xf32> to vector<8xf32>
    %9 = vector.shape_cast %8 : vector<8xf32> to vector<8x1xf32>
    %c0_6 = arith.constant 0 : index
    %c0_7 = arith.constant 0 : index
    %c0_8 = arith.constant 0 : index
    %10 = vector.load %arg3[%c0_6, %c0_7, %c0_8] : memref<1x8x1xf32, #tpu.memory_space<vmem>>, vector<1x8x1xf32>
    %11 = vector.shape_cast %10 : vector<1x8x1xf32> to vector<8x1xf32>
    %12 = vector.shape_cast %9 : vector<8x1xf32> to vector<1x8x1xf32>
    tpu.vector_store %arg3[%c0_6, %c0_7, %c0_8], %12 {strides = array<i32>} : memref<1x8x1xf32, #tpu.memory_space<vmem>>, vector<1x8x1xf32>,
    return
  }
  func.func @transform_0(%arg0: i32) -> (i32, i32, i32) {
    %c0_i32 = arith.constant 0 : i32
    %c0_i32_0 = arith.constant 0 : i32
    %c0_i32_1 = arith.constant 0 : i32
    return %arg0, %c0_i32, %c0_i32_0 : i32, i32, i32
  }
  func.func @transform_1(%arg0: i32) -> (i32, i32, i32) {
    %c0_i32 = arith.constant 0 : i32
    %c0_i32_0 = arith.constant 0 : i32
    %c0_i32_1 = arith.constant 0 : i32
    return %arg0, %c0_i32, %c0_i32_0 : i32, i32, i32
  }
  func.func @transform_2(%arg0: i32) -> (i32, i32, i32) {
    %c0_i32 = arith.constant 0 : i32
    %c0_i32_0 = arith.constant 0 : i32
    %c0_i32_1 = arith.constant 0 : i32
    return %arg0, %c0_i32, %c0_i32_0 : i32, i32, i32
  }
}

</mosaic_0001>

<llo_original>
// kernel: tpu_custom_call.1
$region0: #{tpu_custom_call.1}
  #allocation0 [shape = 'u32[]', space=smem, size = 0x4, offset = 0x4, fixed_abs, tag = 'smem constant byte address 0x4 - core index']
  #allocation1 [shape = 'u32[72,128]{1,0:T(1,128)}', space=vmem, size = 0x9000, scoped, tag = 'internal scratch']
  %s0 = inlined_call_operand.hbm [shape: f32[2,8,256], index: 0, kind: input, shape index: {}]
  %s1 = inlined_call_operand.vmem [shape: f32[2,8,1], index: 1, kind: output, shape index: {0}]
  %s2 = inlined_call_operand.vmem [shape: f32[2,8,1], index: 2, kind: output, shape index: {1}]
  %3 = xla_tuple %s1, %s2
  %s4 = sld [smem:[#allocation0]]
  $region49: #{tpu_custom_call.1} parent=0
    _
  %s6 = ssub.s32 1, %s4
  %s7 = scalar_select 0, %s6, %s4
  $region1: #{tpu_custom_call.1} parent=0
    #allocation2 [shape = 'u8[16384]{0}', space=vmem, size = 0x4000, scoped, tag = 'input window, operand 0']
    #allocation3 [shape = 's32[2]{0}', space=sflag, size = 0x8, scoped, tag = 'scoped memory for tpu_custom_call.1']
    %8 = vsyncpa [#allocation3], 0
    %s9 = scalar_lea.sflag [#allocation3], 1
    %10 = vsyncpa %s9, 0
    loop: start=0, step=1, limit=4
    $region2: #{tpu_custom_call.1} parent=1 // loop_pre_header
      _
    $region3: #{tpu_custom_call.1} parent=1 // loop_header
      %s12 = sphi 0, %s16
      %p13 = scmp.ge.s32.totalorder %s12, 4
      %s22 = sphi 0, %s24
      %s25 = sphi 0, %s22
      %s26 = sphi 0, %s25
      %s42 = sphi 0, %s26
      %s48 = sphi 0, %s50
      %s51 = sphi 0, %s48
      %s52 = sphi 0, %s51
      %s68 = sphi 0, %s52
      %s74 = sphi 0, %s76
      %s77 = sphi 0, %s74
      %s78 = sphi 0, %s77
      %s94 = sphi 0, %s78
    $region4: #{tpu_custom_call.1} parent=1 // loop_header_branch
      %15 = sbr.rel (%p13) target = $region8
    $region5: #{tpu_custom_call.1} parent=1 // loop_body
      %s17 = ssub.s32 %s12, 1
      %s18 = ssub.s32 %s12, 2
      %s19 = sadd.s32 %s12, 1
      %s20 = ssub.s32 %s12, %s19
      %p21 = scmp.eq.s32.totalorder %s20, 0
      %s23 = sadd.s32 %s22, 1
      %s24 = scalar_select %p21, %s22, %s23
      %p27 = pneg %p21
      %p28 = scmp.eq.s32.totalorder %s12, 1
      %p29 = por %p27, %p28
      %p30 = scmp.ne.s32.totalorder %s22, %s25
      %p31 = scmp.eq.s32.totalorder %s12, 0
      %p32 = por %p30, %p31
      %p33 = scmp.ne.s32.totalorder %s22, %s25
      %p34 = scmp.eq.s32.totalorder %s17, 1
      %p35 = por %p33, %p34
      %p36 = scmp.ne.s32.totalorder %s25, %s26
      %p37 = scmp.eq.s32.totalorder %s17, 0
      %p38 = por %p36, %p37
      %p39 = scmp.ne.s32.totalorder %s25, %s26
      %p40 = scmp.eq.s32.totalorder %s18, 1
      %p41 = por %p39, %p40
      %p43 = scmp.ne.s32.totalorder %s26, %s42
      %p44 = scmp.eq.s32.totalorder %s18, 0
      %p45 = por %p43, %p44
      %s46 = ssub.s32 %s12, %s19
      %p47 = scmp.eq.s32.totalorder %s46, 0
      %s49 = sadd.s32 %s48, 1
      %s50 = scalar_select %p47, %s48, %s49
      %p53 = pneg %p47
      %p54 = scmp.eq.s32.totalorder %s12, 1
      %p55 = por %p53, %p54
      %p56 = scmp.ne.s32.totalorder %s48, %s51
      %p57 = scmp.eq.s32.totalorder %s12, 0
      %p58 = por %p56, %p57
      %p59 = scmp.ne.s32.totalorder %s48, %s51
      %p60 = scmp.eq.s32.totalorder %s17, 1
      %p61 = por %p59, %p60
      %p62 = scmp.ne.s32.totalorder %s51, %s52
      %p63 = scmp.eq.s32.totalorder %s17, 0
      %p64 = por %p62, %p63
      %p65 = scmp.ne.s32.totalorder %s51, %s52
      %p66 = scmp.eq.s32.totalorder %s18, 1
      %p67 = por %p65, %p66
      %p69 = scmp.ne.s32.totalorder %s52, %s68
      %p70 = scmp.eq.s32.totalorder %s18, 0
      %p71 = por %p69, %p70
      %s72 = ssub.s32 %s12, %s19
      %p73 = scmp.eq.s32.totalorder %s72, 0
      %s75 = sadd.s32 %s74, 1
      %s76 = scalar_select %p73, %s74, %s75
      %p79 = pneg %p73
      %p80 = scmp.eq.s32.totalorder %s12, 1
      %p81 = por %p79, %p80
      %p82 = scmp.ne.s32.totalorder %s74, %s77
      %p83 = scmp.eq.s32.totalorder %s12, 0
      %p84 = por %p82, %p83
      %p85 = scmp.ne.s32.totalorder %s74, %s77
      %p86 = scmp.eq.s32.totalorder %s17, 1
      %p87 = por %p85, %p86
      %p88 = scmp.ne.s32.totalorder %s77, %s78
      %p89 = scmp.eq.s32.totalorder %s17, 0
      %p90 = por %p88, %p89
      %p91 = scmp.ne.s32.totalorder %s77, %s78
      %p92 = scmp.eq.s32.totalorder %s18, 1
      %p93 = por %p91, %p92
      %p95 = scmp.ne.s32.totalorder %s78, %s94
      %p96 = scmp.eq.s32.totalorder %s18, 0
      %p97 = por %p95, %p96
      %p98 = scmp.le.s32.totalorder 1, %s12
      %p99 = scmp.lt.s32.totalorder %s12, 3
      %p100 = pnand %p98, %p99
      %p101 = pneg %p100
      // Predicated region
      $region9: #{tpu_custom_call.1} parent=5 // pred_check
        _
      $region10: #{tpu_custom_call.1} parent=5 // pred_check_branch
        %103 = sbr.rel (%p100) target = $region12
      $region11: #{tpu_custom_call.1} parent=5 // pred_region
        %s104 = ssub.s32 %s12, 1
      $region12: #{tpu_custom_call.1} parent=5 // pred_fallthru
        _
      %p105 = scmp.lt.s32.totalorder %s12, 2
      // Predicated region
      $region13: #{tpu_custom_call.1} parent=5 // pred_check
        %p106 = pneg %p105
      $region14: #{tpu_custom_call.1} parent=5 // pred_check_branch
        %108 = sbr.rel (%p106) target = $region16
      $region15: #{tpu_custom_call.1} parent=5 // pred_region
        // Predicated region
        $region17: #{tpu_custom_call.1} parent=15 // pred_check
          %p109 = pneg %p32
        $region18: #{tpu_custom_call.1} parent=15 // pred_check_branch
          %111 = sbr.rel (%p109) target = $region20
        $region19: #{tpu_custom_call.1} parent=15 // pred_region
          %s112 = sand.u32 %s22, 1
          %s113 = scalar_lea.sflag [#allocation3], %s112
          %s114 = sand.u32 %s22, 1
          %s115 = smul.addr %s114, 16
          %s116 = scalar_lea.vmem [#allocation2], %s115
          %118 = vsyncadd %s113, 0
          %s119 = smul.addr %s12, 2
          %s120 = smul.addr %s119, 8
          %s121 = scalar_lea.hbm %s0, %s120
          %s123 = sshll.u32 %s121, 4
          %s124 = int_to_ptr.hbm [resolvable:$true] %s123
          %s125 = sshll.u32 %s116, 4
          %s126 = int_to_ptr.vmem [resolvable:$true] %s125
          %128 = dma.hbm_to_vmem [thread:$0]  %s124, 256, %s126, %s113
        $region20: #{tpu_custom_call.1} parent=15 // pred_fallthru
          _
      $region16: #{tpu_custom_call.1} parent=5 // pred_fallthru
        _
      %p129 = scmp.le.s32.totalorder 1, %s12
      %p130 = scmp.lt.s32.totalorder %s12, 3
      %p131 = pnand %p129, %p130
      %p132 = pneg %p131
      // Predicated region
      $region21: #{tpu_custom_call.1} parent=5 // pred_check
        _
      $region22: #{tpu_custom_call.1} parent=5 // pred_check_branch
        %134 = sbr.rel (%p131) target = $region24
      $region23: #{tpu_custom_call.1} parent=5 // pred_region
        %s135 = ssub.s32 %s12, 1
        %s136 = sand.u32 %s25, 1
        %s137 = scalar_lea.sflag [#allocation3], %s136
        %s138 = sand.u32 %s25, 1
        %s139 = smul.addr %s138, 16
        %s140 = scalar_lea.vmem [#allocation2], %s139
        // Predicated region
        $region25: #{tpu_custom_call.1} parent=23 // pred_check
          %p141 = pneg %p38
        $region26: #{tpu_custom_call.1} parent=23 // pred_check_branch
          %143 = sbr.rel (%p141) target = $region28
        $region27: #{tpu_custom_call.1} parent=23 // pred_region
          %145 = dma.done %s137, 256
        $region28: #{tpu_custom_call.1} parent=23 // pred_fallthru
          _
        %s146 = sand.u32 %s25, 1
        %s147 = scalar_lea.sflag [#allocation3], %s146
        %s148 = sand.u32 %s25, 1
        %s149 = smul.addr %s148, 16
        %s150 = scalar_lea.vmem [#allocation2], %s149
        %p151 = pneg %p38
        %p152 = pneg %p35
        %p153 = pneg %p64
        %p154 = pneg %p61
        %p155 = scmp.lt.s32.totalorder %s17, 1
        %s156 = scalar_select %p155, %s17, 1
        %s157 = smul.addr %s156, 8
        %s158 = scalar_lea.vmem %s1, %s157
        %p159 = pneg %p90
        %p160 = pneg %p87
        %p161 = scmp.lt.s32.totalorder %s17, 1
        %s162 = scalar_select %p161, %s17, 1
        %s163 = smul.addr %s162, 8
        %s164 = scalar_lea.vmem %s2, %s163
        %p165 = scmp.lt.s32.totalorder %s17, 1
        %s166 = scalar_select %p165, %s17, 1
        %s167 = smul.addr %s166, 8
        %s168 = scalar_lea.vmem %s1, %s167
        %p169 = scmp.lt.s32.totalorder %s17, 1
        %s170 = scalar_select %p169, %s17, 1
        %s171 = smul.addr %s170, 8
        %s172 = scalar_lea.vmem %s2, %s171
        %v173 = vld [vmem:[%s140] sm:$0xff]
        %v174 = vld [vmem:[%s140 + $0x8] sm:$0xff]
        %v175 = vadd.f32 %v173, %v174
        %176 = vadd.xlane.f32.xlu0 %v175
        %v177 = vpop.xlane.xlu0 %176
        %vm178 = vcmask 7168
        %179 = vst.msk [vmem:[%s168] sm:$0xff] %vm178, %v177
        %v180 = vmul.f32 %v173, %v173
        %v181 = vmul.f32 %v174, %v174
        %v182 = vadd.f32 %v180, %v181
        %183 = vadd.xlane.f32.xlu0 %v182
        %v184 = vpop.xlane.xlu0 %183
        %185 = vst.msk [vmem:[%s172] sm:$0xff] %vm178, %v184
        %p186 = scmp.lt.s32.totalorder %s17, 1
        %s187 = scalar_select %p186, %s17, 1
        %s188 = smul.addr %s187, 8
        %s189 = scalar_lea.vmem %s1, %s188
        %p190 = scmp.lt.s32.totalorder %s17, 1
        %s191 = scalar_select %p190, %s17, 1
        %s192 = smul.addr %s191, 8
        %s193 = scalar_lea.vmem %s2, %s192
        // Predicated region
        $region29: #{tpu_custom_call.1} parent=23 // pred_check
          %p194 = pneg %p61
        $region30: #{tpu_custom_call.1} parent=23 // pred_check_branch
          %196 = sbr.rel (%p194) target = $region32
        $region31: #{tpu_custom_call.1} parent=23 // pred_region
          _
        $region32: #{tpu_custom_call.1} parent=23 // pred_fallthru
          _
        // Predicated region
        $region33: #{tpu_custom_call.1} parent=23 // pred_check
          %p197 = pneg %p87
        $region34: #{tpu_custom_call.1} parent=23 // pred_check_branch
          %199 = sbr.rel (%p197) target = $region36
        $region35: #{tpu_custom_call.1} parent=23 // pred_region
          _
        $region36: #{tpu_custom_call.1} parent=23 // pred_fallthru
          _
      $region24: #{tpu_custom_call.1} parent=5 // pred_fallthru
        _
      %p200 = scmp.le.s32.totalorder 2, %s12
      // Predicated region
      $region37: #{tpu_custom_call.1} parent=5 // pred_check
        %p201 = pneg %p200
      $region38: #{tpu_custom_call.1} parent=5 // pred_check_branch
        %203 = sbr.rel (%p201) target = $region40
      $region39: #{tpu_custom_call.1} parent=5 // pred_region
        %s204 = ssub.s32 %s12, 2
        // Predicated region
        $region41: #{tpu_custom_call.1} parent=39 // pred_check
          %p205 = pneg %p67
        $region42: #{tpu_custom_call.1} parent=39 // pred_check_branch
          %207 = sbr.rel (%p205) target = $region44
        $region43: #{tpu_custom_call.1} parent=39 // pred_region
          %p208 = scmp.lt.s32.totalorder %s18, 1
          %s209 = scalar_select %p208, %s18, 1
          %s210 = smul.addr %s209, 8
          %s211 = scalar_lea.vmem %s1, %s210
        $region44: #{tpu_custom_call.1} parent=39 // pred_fallthru
          _
        // Predicated region
        $region45: #{tpu_custom_call.1} parent=39 // pred_check
          %p212 = pneg %p93
        $region46: #{tpu_custom_call.1} parent=39 // pred_check_branch
          %214 = sbr.rel (%p212) target = $region48
        $region47: #{tpu_custom_call.1} parent=39 // pred_region
          %p215 = scmp.lt.s32.totalorder %s18, 1
          %s216 = scalar_select %p215, %s18, 1
          %s217 = smul.addr %s216, 8
          %s218 = scalar_lea.vmem %s2, %s217
        $region48: #{tpu_custom_call.1} parent=39 // pred_fallthru
          _
      $region40: #{tpu_custom_call.1} parent=5 // pred_fallthru
        _
    $region6: #{tpu_custom_call.1} parent=1 // loop_footer
      %s16 = sadd.s32 1, %s12
    $region7: #{tpu_custom_call.1} parent=1 // loop_footer_branch
      %11 = sbr.rel target = $region3
    $region8: #{tpu_custom_call.1} parent=1 // loop_exit
      _
    %219 = vsyncpa [#allocation3], 1
    %s220 = scalar_lea.sflag [#allocation3], 1
    %221 = vsyncpa %s220, 1

</llo_original>
